<compile_context>
chip_gen: v7x
topology: tpu7x:2x2x1
jax: 0.10.0
libtpu: 0.0.40
codegen_flags: <defaults>
</compile_context>

<pallas_src>
import jax
import jax.numpy as jnp
import numpy as np
from jax.experimental import pallas as pl
from jax.experimental.pallas import tpu as pltpu


def _cdiv(a: int, b: int) -> int:
    return (a + b - 1) // b


def _round_down(v: int, m: int) -> int:
    return (v // m) * m


def _vmem_limit_bytes() -> int:
    """Scoped-VMEM limit: v7x-safe default (48 MiB of its 64 MiB physical),
    raised to 96 MiB when the chip positively reports >=128 MiB (v5e/v6e)."""
    try:
        get_info = getattr(pltpu, "get_tpu_info", None)
        if get_info is not None:
            info = get_info()
            if int(getattr(info, "vmem_capacity_bytes", 0)) >= 100 * 1024 * 1024:
                return 96 * 1024 * 1024
    except Exception:
        pass
    return 48 * 1024 * 1024


def _make_kernel(eps: float, inv_c: float):
    def kernel(g_ref, x_ref, o_ref):
        # x tile: (1, C, HW_BLK)  or  (1, C, S_BLK, 128); channel axis is 1.
        x = x_ref[...].astype(jnp.float32)
        mean = jnp.sum(x, axis=1, keepdims=True) * inv_c
        xc = x - mean
        var = jnp.sum(xc * xc, axis=1, keepdims=True) * inv_c   # unbiased=False
        inv_std = jax.lax.rsqrt(var + eps)                      # EUP
        g = g_ref[...].astype(jnp.float32)                      # per-channel gain
        o_ref[...] = (xc * inv_std * g).astype(o_ref.dtype)
    return kernel


def chan_layer_norm(x, g, *, eps: float = 1e-5):
    """Pallas implementation of ChanLayerNorm.forward.

    x : (N, C, H, W)        NCHW activations, any float dtype
    g : (1, C, 1, 1) or (C,) per-channel gain
    """
    N, C, H, W = x.shape
    HW = H * W
    itemsize = jnp.dtype(x.dtype).itemsize

    vmem_limit = _vmem_limit_bytes()
    # Budget for ONE f32 copy of the x tile.  Total footprint is roughly
    # 2 double-buffered input tiles + 2 double-buffered output tiles (x dtype)
    # plus ~3 f32-sized in-kernel temporaries, so limit/12 keeps a wide margin
    # (v7x: 48/12 = 4 MiB tiles -> ~<30 MiB peak; v5e/v6e: 8 MiB tiles).
    tile_f32_budget = max(512 * 1024, vmem_limit // 12)
    max_elems = tile_f32_budget // 4

    # Aim for >= ~8 total grid steps (when the input allows it) so both v7x
    # TensorCores get work and the pipeline has steps to overlap.
    want_blocks = max(1, _cdiv(8, N))

    kernel = _make_kernel(float(eps), 1.0 / float(C))
    g32 = jnp.reshape(jnp.asarray(g, dtype=jnp.float32), (C,))

    use_packed = (HW % 128 == 0) and (C * itemsize < 32)

    if use_packed:
        # Small C: carry spatial on sublanes+lanes -> full sublane occupancy,
        # channel reduction is plain VPU adds across vregs.
        S = HW // 128
        x_in = x.reshape(N, C, S, 128)
        g_in = g32.reshape(1, C, 1, 1)

        budget_sub = max(8, _round_down(max_elems // (C * 128), 8))
        if want_blocks > 1 and S >= 16:
            cap_sub = max(8, _round_down(S // want_blocks, 8))
        else:
            cap_sub = S
        s_blk = min(budget_sub, cap_sub, S)        # multiple of 8, or == S
        n_blk = _cdiv(S, s_blk)

        x_spec = pl.BlockSpec((1, C, s_blk, 128), lambda n, j: (n, 0, j, 0))
        g_spec = pl.BlockSpec((1, C, 1, 1), lambda n, j: (0, 0, 0, 0))
        o_spec = pl.BlockSpec((1, C, s_blk, 128), lambda n, j: (n, 0, j, 0))
        out_shape = jax.ShapeDtypeStruct((N, C, S, 128), x.dtype)
    else:
        # General layout: C on sublanes, lane-dense spatial blocks (multiple
        # of 128); ragged last block when HW is not a multiple of the block.
        x_in = x.reshape(N, C, HW)
        g_in = g32.reshape(1, C, 1)

        # Sublane padding of the (C, hw_blk) slab in VMEM (f32: 8, bf16: 16, ...).
        sublane = 8 if itemsize >= 4 else (32 // itemsize)
        c_pad = _cdiv(C, sublane) * sublane

        if HW <= 128:
            hw_blk = HW                            # full extent (exempt from 128 rule)
        else:
            budget_lanes = max(128, _round_down(max_elems // c_pad, 128))
            if want_blocks > 1:
                cap_lanes = max(128, _round_down(HW // want_blocks, 128))
            else:
                cap_lanes = HW
            hw_blk = max(128, min(budget_lanes, cap_lanes, _round_down(HW, 128)))
        n_blk = _cdiv(HW, hw_blk)

        x_spec = pl.BlockSpec((1, C, hw_blk), lambda n, j: (n, 0, j))
        g_spec = pl.BlockSpec((1, C, 1), lambda n, j: (0, 0, 0))
        o_spec = pl.BlockSpec((1, C, hw_blk), lambda n, j: (n, 0, j))
        out_shape = jax.ShapeDtypeStruct((N, C, HW), x.dtype)

    cost = pl.CostEstimate(
        flops=7 * N * C * HW,                       # mean / var / normalize
        transcendentals=N * HW,                     # one rsqrt per spatial position
        bytes_accessed=2 * N * C * HW * itemsize,   # read x + write out (g negligible)
    )

    out = pl.pallas_call(
        kernel,
        out_shape=out_shape,
        grid_spec=pltpu.PrefetchScalarGridSpec(
            num_scalar_prefetch=0,
            grid=(N, n_blk),
            in_specs=[g_spec, x_spec],
            out_specs=o_spec,
        ),
        compiler_params=pltpu.CompilerParams(
            dimension_semantics=("parallel", "parallel"),
            vmem_limit_bytes=vmem_limit,
        ),
        cost_estimate=cost,
    )(g_in, x_in)

    return out.reshape(N, C, H, W)


def _reference(x, g, eps=1e-5):
    x = np.asarray(x, dtype=np.float32)
    g = np.asarray(g, dtype=np.float32).reshape(1, -1, 1, 1)
    mean = x.mean(axis=1, keepdims=True)
    var = ((x - mean) ** 2).mean(axis=1, keepdims=True)   # unbiased=False
    return (x - mean) / np.sqrt(var + eps) * g


if __name__ == "__main__":
    eps = 1e-5
    key = jax.random.PRNGKey(0)

    # Small shapes consistent with the module (NCHW activations, per-channel gain).
    cases = [
        (2, 4, 16, 16),   # primary: small-C packed layout (HW % 128 == 0)
        (1, 16, 12, 15),  # general layout with a ragged non-multiple-of-128 tail
        (2, 12, 7, 9),    # general layout, full-extent spatial block (HW < 128)
    ]
    for (N, C, H, W) in cases:
        key, kx, kg = jax.random.split(key, 3)
        x = jax.random.normal(kx, (N, C, H, W), dtype=jnp.float32)
        # PyTorch initializes g to ones; use non-trivial values so the gain
        # path is actually exercised.
        g = 1.0 + 0.1 * jax.random.normal(kg, (1, C, 1, 1), dtype=jnp.float32)

        out = jax.block_until_ready(chan_layer_norm(x, g, eps=eps))
        ref = _reference(x, g, eps=eps)
        np.testing.assert_allclose(np.asarray(out), ref, rtol=1e-5, atol=1e-5)

    print("KERNEL_OK")
</pallas_src>

<mosaic_0001>
module attributes {stable_mosaic.version = 11 : i64} {
  func.func @kernel(%arg0: i32, %arg1: i32, %arg2: memref<1x4x1x1xf32, #tpu.memory_space<vmem>>, %arg3: memref<1x4x2x128xf32, #tpu.memory_space<vmem>>, %arg4: memref<1x4x2x128xf32, #tpu.memory_space<vmem>>) attributes {dimension_semantics = [#tpu.dimension_semantics<parallel>, #tpu.dimension_semantics<parallel>], iteration_bounds = array<i64: 2, 1>, scalar_prefetch = 0 : i64, scratch_operands = 0 : i64, tpu.core_type = #tpu.core_type<tc>, window_params = [{pipeline_mode = #tpu.pipeline_mode<synchronous>, transform_indices = @transform_0, window_bounds = array<i64: 1, 4, 1, 1>}, {transform_indices = @transform_1, window_bounds = array<i64: 1, 4, 2, 128>}, {transform_indices = @transform_2, window_bounds = array<i64: 1, 4, 2, 128>}]} {
    %c0 = arith.constant 0 : index
    %c0_0 = arith.constant 0 : index
    %c0_1 = arith.constant 0 : index
    %c0_2 = arith.constant 0 : index
    %0 = vector.load %arg3[%c0, %c0_0, %c0_1, %c0_2] : memref<1x4x2x128xf32, #tpu.memory_space<vmem>>, vector<1x4x2x128xf32>
    %cst = arith.constant dense<0.000000e+00> : vector<1x2x128xf32>
    %1 = vector.multi_reduction <add>, %0, %cst [1] : vector<1x4x2x128xf32> to vector<1x2x128xf32>
    %2 = vector.shape_cast %1 : vector<1x2x128xf32> to vector<1x1x2x128xf32>
    %cst_3 = arith.constant 2.500000e-01 : f32
    %3 = vector.broadcast %cst_3 : f32 to vector<1x1x2x128xf32>
    %4 = arith.mulf %2, %3 : vector<1x1x2x128xf32>
    %5 = vector.broadcast %4 : vector<1x1x2x128xf32> to vector<1x4x2x128xf32>
    %6 = arith.subf %0, %5 : vector<1x4x2x128xf32>
    %7 = arith.mulf %6, %6 : vector<1x4x2x128xf32>
    %cst_4 = arith.constant dense<0.000000e+00> : vector<1x2x128xf32>
    %8 = vector.multi_reduction <add>, %7, %cst_4 [1] : vector<1x4x2x128xf32> to vector<1x2x128xf32>
    %9 = vector.shape_cast %8 : vector<1x2x128xf32> to vector<1x1x2x128xf32>
    %cst_5 = arith.constant 2.500000e-01 : f32
    %10 = vector.broadcast %cst_5 : f32 to vector<1x1x2x128xf32>
    %11 = arith.mulf %9, %10 : vector<1x1x2x128xf32>
    %cst_6 = arith.constant 9.99999974E-6 : f32
    %12 = vector.broadcast %cst_6 : f32 to vector<1x1x2x128xf32>
    %13 = arith.addf %11, %12 : vector<1x1x2x128xf32>
    %14 = math.rsqrt %13 : vector<1x1x2x128xf32>
    %c0_7 = arith.constant 0 : index
    %c0_8 = arith.constant 0 : index
    %c0_9 = arith.constant 0 : index
    %c0_10 = arith.constant 0 : index
    %15 = vector.load %arg2[%c0_7, %c0_8, %c0_9, %c0_10] : memref<1x4x1x1xf32, #tpu.memory_space<vmem>>, vector<1x4x1x1xf32>
    %16 = vector.broadcast %14 : vector<1x1x2x128xf32> to vector<1x4x2x128xf32>
    %17 = arith.mulf %6, %16 : vector<1x4x2x128xf32>
    %18 = vector.broadcast %15 : vector<1x4x1x1xf32> to vector<1x4x2x128xf32>
    %19 = arith.mulf %17, %18 : vector<1x4x2x128xf32>
    %c0_11 = arith.constant 0 : index
    %c0_12 = arith.constant 0 : index
    %c0_13 = arith.constant 0 : index
    %c0_14 = arith.constant 0 : index
    %20 = vector.load %arg4[%c0_11, %c0_12, %c0_13, %c0_14] : memref<1x4x2x128xf32, #tpu.memory_space<vmem>>, vector<1x4x2x128xf32>
    tpu.vector_store %arg4[%c0_11, %c0_12, %c0_13, %c0_14], %19 {strides = array<i32>} : memref<1x4x2x128xf32, #tpu.memory_space<vmem>>, vector<1x4x2x128xf32>,
    return
  }
  func.func @transform_0(%arg0: i32, %arg1: i32) -> (i32, i32, i32, i32) {
    %c0_i32 = arith.constant 0 : i32
    %c0_i32_0 = arith.constant 0 : i32
    %c0_i32_1 = arith.constant 0 : i32
    %c0_i32_2 = arith.constant 0 : i32
    %c0_i32_3 = arith.constant 0 : i32
    return %c0_i32, %c0_i32_0, %c0_i32_1, %c0_i32_2 : i32, i32, i32, i32
  }
  func.func @transform_1(%arg0: i32, %arg1: i32) -> (i32, i32, i32, i32) {
    %c0_i32 = arith.constant 0 : i32
    %c0_i32_0 = arith.constant 0 : i32
    %c0_i32_1 = arith.constant 0 : i32
    return %arg0, %c0_i32, %arg1, %c0_i32_0 : i32, i32, i32, i32
  }
  func.func @transform_2(%arg0: i32, %arg1: i32) -> (i32, i32, i32, i32) {
    %c0_i32 = arith.constant 0 : i32
    %c0_i32_0 = arith.constant 0 : i32
    %c0_i32_1 = arith.constant 0 : i32
    return %arg0, %c0_i32, %arg1, %c0_i32_0 : i32, i32, i32, i32
  }
}

</mosaic_0001>

<llo_original>
// kernel: tpu_custom_call.1
$region0: #{tpu_custom_call.1}
  #allocation0 [shape = 'u32[]', space=smem, size = 0x4, offset = 0x4, fixed_abs, tag = 'smem constant byte address 0x4 - core index']
  #allocation1 [shape = 'u32[144,128]{1,0:T(1,128)}', space=vmem, size = 0x12000, scoped, tag = 'internal scratch']
  %s0 = inlined_call_operand.vmem [shape: f32[1,4,1,1], index: 0, kind: input, shape index: {}]
  %s1 = inlined_call_operand.hbm [shape: f32[2,4,2,128], index: 1, kind: input, shape index: {}]
  %s2 = inlined_call_operand.hbm [shape: f32[2,4,2,128], index: 2, kind: output, shape index: {}]
  %s3 = sld [smem:[#allocation0]]
  $region45: #{tpu_custom_call.1} parent=0
    _
  %s5 = ssub.s32 1, %s3
  %s6 = scalar_select 0, %s5, %s3
  $region1: #{tpu_custom_call.1} parent=0
    #allocation2 [shape = 'u8[8192]{0}', space=vmem, size = 0x2000, scoped, tag = 'input window, operand 1']
    #allocation3 [shape = 's32[2]{0}', space=sflag, size = 0x8, scoped, tag = 'scoped memory for tpu_custom_call.1']
    #allocation4 [shape = 's32[2]{0}', space=sflag, size = 0x8, scoped, tag = 'scoped memory for tpu_custom_call.1']
    #allocation5 [shape = 'u8[8192]{0}', space=vmem, size = 0x2000, scoped, tag = 'output window, operand 0']
    %7 = vsyncpa [#allocation3], 0
    %s8 = scalar_lea.sflag [#allocation3], 1
    %9 = vsyncpa %s8, 0
    %10 = vsyncpa [#allocation4], 0
    %s11 = scalar_lea.sflag [#allocation4], 1
    %12 = vsyncpa %s11, 0
    loop: start=0, step=1, limit=4
    $region2: #{tpu_custom_call.1} parent=1 // loop_pre_header
      _
    $region3: #{tpu_custom_call.1} parent=1 // loop_header
      %s14 = sphi 0, %s18
      %p15 = scmp.ge.s32.totalorder %s14, 4
      %s21 = sphi 0, %s33
      %s22 = sphi 0, %s29
      %s23 = sphi 0, %s21
      %s24 = sphi 0, %s22
      %s25 = sphi 0, %s23
      %s26 = sphi 0, %s24
      %s34 = sphi 0, %s34
      %s36 = sphi 0, %s34
      %s37 = sphi 0, %s36
      %s51 = sphi 0, %s37
      %s59 = sphi 0, %s61
      %s62 = sphi 0, %s59
      %s63 = sphi 0, %s62
      %s79 = sphi 0, %s63
      %s87 = sphi 0, %s89
      %s90 = sphi 0, %s87
      %s91 = sphi 0, %s90
      %s107 = sphi 0, %s91
    $region4: #{tpu_custom_call.1} parent=1 // loop_header_branch
      %17 = sbr.rel (%p15) target = $region8
    $region5: #{tpu_custom_call.1} parent=1 // loop_body
      %s19 = ssub.s32 %s14, 1
      %s20 = ssub.s32 %s14, 2
      %s27 = sadd.s32 1, %s22
      %p28 = scmp.ge.s32.totalorder %s27, 1
      %s29 = scalar_select %p28, 0, %s27
      %s30 = sadd.s32 1, %s21
      %s31 = scalar_select %p28, %s30, %s21
      %p32 = scmp.ge.s32.totalorder %s31, 2
      %s33 = scalar_select %p32, 0, %s31
      %s35 = sadd.s32 %s34, 1
      %p38 = scmp.eq.s32.totalorder %s14, 1
      %p39 = scmp.ne.s32.totalorder %s34, %s36
      %p40 = scmp.eq.s32.totalorder %s14, 0
      %p41 = por %p39, %p40
      %p42 = scmp.ne.s32.totalorder %s34, %s36
      %p43 = scmp.eq.s32.totalorder %s19, 1
      %p44 = por %p42, %p43
      %p45 = scmp.ne.s32.totalorder %s36, %s37
      %p46 = scmp.eq.s32.totalorder %s19, 0
      %p47 = por %p45, %p46
      %p48 = scmp.ne.s32.totalorder %s36, %s37
      %p49 = scmp.eq.s32.totalorder %s20, 1
      %p50 = por %p48, %p49
      %p52 = scmp.ne.s32.totalorder %s37, %s51
      %p53 = scmp.eq.s32.totalorder %s20, 0
      %p54 = por %p52, %p53
      %s55 = ssub.s32 %s21, %s33
      %s56 = ssub.s32 %s22, %s29
      %s57 = sor.u32 %s55, %s56
      %p58 = scmp.eq.s32.totalorder %s57, 0
      %s60 = sadd.s32 %s59, 1
      %s61 = scalar_select %p58, %s59, %s60
      %p64 = pneg %p58
      %p65 = scmp.eq.s32.totalorder %s14, 1
      %p66 = por %p64, %p65
      %p67 = scmp.ne.s32.totalorder %s59, %s62
      %p68 = scmp.eq.s32.totalorder %s14, 0
      %p69 = por %p67, %p68
      %p70 = scmp.ne.s32.totalorder %s59, %s62
      %p71 = scmp.eq.s32.totalorder %s19, 1
      %p72 = por %p70, %p71
      %p73 = scmp.ne.s32.totalorder %s62, %s63
      %p74 = scmp.eq.s32.totalorder %s19, 0
      %p75 = por %p73, %p74
      %p76 = scmp.ne.s32.totalorder %s62, %s63
      %p77 = scmp.eq.s32.totalorder %s20, 1
      %p78 = por %p76, %p77
      %p80 = scmp.ne.s32.totalorder %s63, %s79
      %p81 = scmp.eq.s32.totalorder %s20, 0
      %p82 = por %p80, %p81
      %s83 = ssub.s32 %s21, %s33
      %s84 = ssub.s32 %s22, %s29
      %s85 = sor.u32 %s83, %s84
      %p86 = scmp.eq.s32.totalorder %s85, 0
      %s88 = sadd.s32 %s87, 1
      %s89 = scalar_select %p86, %s87, %s88
      %p92 = pneg %p86
      %p93 = scmp.eq.s32.totalorder %s14, 1
      %p94 = por %p92, %p93
      %p95 = scmp.ne.s32.totalorder %s87, %s90
      %p96 = scmp.eq.s32.totalorder %s14, 0
      %p97 = por %p95, %p96
      %p98 = scmp.ne.s32.totalorder %s87, %s90
      %p99 = scmp.eq.s32.totalorder %s19, 1
      %p100 = por %p98, %p99
      %p101 = scmp.ne.s32.totalorder %s90, %s91
      %p102 = scmp.eq.s32.totalorder %s19, 0
      %p103 = por %p101, %p102
      %p104 = scmp.ne.s32.totalorder %s90, %s91
      %p105 = scmp.eq.s32.totalorder %s20, 1
      %p106 = por %p104, %p105
      %p108 = scmp.ne.s32.totalorder %s91, %s107
      %p109 = scmp.eq.s32.totalorder %s20, 0
      %p110 = por %p108, %p109
      %p111 = scmp.le.s32.totalorder 1, %s14
      %p112 = scmp.lt.s32.totalorder %s14, 3
      %p113 = pnand %p111, %p112
      %p114 = pneg %p113
      // Predicated region
      $region9: #{tpu_custom_call.1} parent=5 // pred_check
        _
      $region10: #{tpu_custom_call.1} parent=5 // pred_check_branch
        %116 = sbr.rel (%p113) target = $region12
      $region11: #{tpu_custom_call.1} parent=5 // pred_region
        %s117 = ssub.s32 %s14, 1
        // Predicated region
        $region13: #{tpu_custom_call.1} parent=11 // pred_check
          %p118 = pneg %p47
        $region14: #{tpu_custom_call.1} parent=11 // pred_check_branch
          %120 = sbr.rel (%p118) target = $region16
        $region15: #{tpu_custom_call.1} parent=11 // pred_region
          _
        $region16: #{tpu_custom_call.1} parent=11 // pred_fallthru
          _
      $region12: #{tpu_custom_call.1} parent=5 // pred_fallthru
        _
      %p121 = scmp.lt.s32.totalorder %s14, 2
      // Predicated region
      $region17: #{tpu_custom_call.1} parent=5 // pred_check
        %p122 = pneg %p121
      $region18: #{tpu_custom_call.1} parent=5 // pred_check_branch
        %124 = sbr.rel (%p122) target = $region20
      $region19: #{tpu_custom_call.1} parent=5 // pred_region
        // Predicated region
        $region21: #{tpu_custom_call.1} parent=19 // pred_check
          %p125 = pneg %p69
        $region22: #{tpu_custom_call.1} parent=19 // pred_check_branch
          %127 = sbr.rel (%p125) target = $region24
        $region23: #{tpu_custom_call.1} parent=19 // pred_region
          %s128 = sand.u32 %s59, 1
          %s129 = scalar_lea.sflag [#allocation3], %s128
          %s130 = sand.u32 %s59, 1
          %s131 = smul.addr %s130, 8
          %s132 = scalar_lea.vmem [#allocation2], %s131
          %s134 = ssub.s32 128, 128
          %135 = vsyncadd %s129, %s134
          %s136 = smul.addr %s21, 4
          %s137 = sadd.s32 %s22, %s136
          %s138 = smul.addr %s137, 32
          %s139 = scalar_lea.hbm %s1, %s138
          %s140 = sshll.u32 %s132, 4
          %s141 = int_to_ptr.vmem [resolvable:$true] %s140
          %146 = dma.hbm_to_vmem [thread:$0]  %s139, 128, %s141, %s129, 32, 32, 2
        $region24: #{tpu_custom_call.1} parent=19 // pred_fallthru
          _
      $region20: #{tpu_custom_call.1} parent=5 // pred_fallthru
        _
      %p147 = scmp.le.s32.totalorder 1, %s14
      %p148 = scmp.lt.s32.totalorder %s14, 3
      %p149 = pnand %p147, %p148
      %p150 = pneg %p149
      // Predicated region
      $region25: #{tpu_custom_call.1} parent=5 // pred_check
        _
      $region26: #{tpu_custom_call.1} parent=5 // pred_check_branch
        %152 = sbr.rel (%p149) target = $region28
      $region27: #{tpu_custom_call.1} parent=5 // pred_region
        %s153 = ssub.s32 %s14, 1
        %s154 = sand.u32 %s62, 1
        %s155 = scalar_lea.sflag [#allocation3], %s154
        %s156 = sand.u32 %s62, 1
        %s157 = smul.addr %s156, 8
        %s158 = scalar_lea.vmem [#allocation2], %s157
        // Predicated region
        $region29: #{tpu_custom_call.1} parent=27 // pred_check
          %p159 = pneg %p75
        $region30: #{tpu_custom_call.1} parent=27 // pred_check_branch
          %161 = sbr.rel (%p159) target = $region32
        $region31: #{tpu_custom_call.1} parent=27 // pred_region
          %162 = dma.done %s155, 128
        $region32: #{tpu_custom_call.1} parent=27 // pred_fallthru
          _
        %p163 = pneg %p47
        %p164 = pneg %p44
        %s165 = sand.u32 %s62, 1
        %s166 = scalar_lea.sflag [#allocation3], %s165
        %s167 = sand.u32 %s62, 1
        %s168 = smul.addr %s167, 8
        %s169 = scalar_lea.vmem [#allocation2], %s168
        %p170 = pneg %p75
        %p171 = pneg %p72
        %p172 = pneg %p103
        %p173 = pneg %p100
        %s174 = sand.u32 %s90, 1
        %s175 = scalar_lea.sflag [#allocation4], %s174
        %s176 = sand.u32 %s90, 1
        %s177 = smul.addr %s176, 8
        %s178 = scalar_lea.vmem [#allocation5], %s177
        %v179 = vld [vmem:[%s158] sm:$0x3]
        %v180 = vld [vmem:[%s158 + $0x2] sm:$0x3]
        %v181 = vld [vmem:[%s158 + $0x4] sm:$0x3]
        %v182 = vld [vmem:[%s158 + $0x6] sm:$0x3]
        %vm183 = vcmask 1041408
        %v184 = vsel %vm183, %v179, 0.0
        %v185 = vsel %vm183, %v180, 0.0
        %v186 = vadd.f32 %v184, %v185
        %v187 = vsel %vm183, %v181, 0.0
        %v188 = vadd.f32 %v186, %v187
        %v189 = vsel %vm183, %v182, 0.0
        %v190 = vadd.f32 %v188, %v189
        %v191 = vmul.f32 %v190, 0.25
        %v192 = vsub.f32 %v179, %v191
        %v193 = vsub.f32 %v180, %v191
        %v194 = vsub.f32 %v181, %v191
        %v195 = vsub.f32 %v182, %v191
        %v196 = vmul.f32 %v192, %v192
        %v197 = vmul.f32 %v193, %v193
        %v198 = vmul.f32 %v194, %v194
        %v199 = vmul.f32 %v195, %v195
        %v200 = vsel %vm183, %v196, 0.0
        %v201 = vsel %vm183, %v197, 0.0
        %v202 = vadd.f32 %v200, %v201
        %v203 = vsel %vm183, %v198, 0.0
        %v204 = vadd.f32 %v202, %v203
        %v205 = vsel %vm183, %v199, 0.0
        %v206 = vadd.f32 %v204, %v205
        %v207 = vmul.f32 %v206, 0.25
        %v208 = vadd.f32 %v207, 1e-05
        %v209 = vrsqrt.pop %v208
        %v210 = vld [vmem:[%s0] sm:$0x1]
        %v211 = vld [vmem:[%s0 + $0x1] sm:$0x1]
        %v212 = vld [vmem:[%s0 + $0x2] sm:$0x1]
        %v213 = vld [vmem:[%s0 + $0x3] sm:$0x1]
        %v214 = vmul.f32 %v192, %v209
        %v215 = vmul.f32 %v193, %v209
        %v216 = vmul.f32 %v194, %v209
        %v217 = vmul.f32 %v195, %v209
        %v222 = vlaneseq
        %v223 = vshrl.u32 %v222, 7
        %v224 = vsub.s32 0, %v223
        %v225 = vrot.slane %v210, %v224
        %v226 = vlaneseq
        %v227 = vshrl.u32 %v226, 7
        %v228 = vsub.s32 0, %v227
        %v229 = vrot.slane %v211, %v228
        %v230 = vlaneseq
        %v231 = vshrl.u32 %v230, 7
        %v232 = vsub.s32 0, %v231
        %v233 = vrot.slane %v212, %v232
        %v234 = vlaneseq
        %v235 = vshrl.u32 %v234, 7
        %v236 = vsub.s32 0, %v235
        %v237 = vrot.slane %v213, %v236
        %238 = vset.pattern.permute.xlu0 0
        %239 = vperm.xlu0 %238, %v225
        %v240 = vpop.permute.xlu0 %239
        %242 = vset.pattern.permute.xlu0 0
        %243 = vperm.xlu0 %242, %v229
        %v244 = vpop.permute.xlu0 %243
        %246 = vset.pattern.permute.xlu0 0
        %247 = vperm.xlu0 %246, %v233
        %v248 = vpop.permute.xlu0 %247
        %250 = vset.pattern.permute.xlu0 0
        %251 = vperm.xlu0 %250, %v237
        %v252 = vpop.permute.xlu0 %251
        %v254 = vmul.f32 %v214, %v240
        %v255 = vmul.f32 %v215, %v244
        %v256 = vmul.f32 %v216, %v248
        %v257 = vmul.f32 %v217, %v252
        %258 = vst [vmem:[%s178] sm:$0x3] %v254
        %259 = vst [vmem:[%s178 + $0x2] sm:$0x3] %v255
        %260 = vst [vmem:[%s178 + $0x4] sm:$0x3] %v256
        %261 = vst [vmem:[%s178 + $0x6] sm:$0x3] %v257
        %s262 = sand.u32 %s90, 1
        %s263 = scalar_lea.sflag [#allocation4], %s262
        %s264 = sand.u32 %s90, 1
        %s265 = smul.addr %s264, 8
        %s266 = scalar_lea.vmem [#allocation5], %s265
        // Predicated region
        $region33: #{tpu_custom_call.1} parent=27 // pred_check
          %p267 = pneg %p100
        $region34: #{tpu_custom_call.1} parent=27 // pred_check_branch
          %269 = sbr.rel (%p267) target = $region36
        $region35: #{tpu_custom_call.1} parent=27 // pred_region
          %s271 = ssub.s32 128, 128
          %272 = vsyncadd %s263, %s271
          %s273 = smul.addr %s23, 4
          %s274 = sadd.s32 %s24, %s273
          %s275 = smul.addr %s274, 32
          %s276 = scalar_lea.hbm %s2, %s275
          %s277 = sshll.u32 %s266, 4
          %s278 = int_to_ptr.vmem [resolvable:$true] %s277
          %283 = dma.vmem_to_hbm [thread:$0]  %s278, 128, %s276, %s263, 32, 32, 2
        $region36: #{tpu_custom_call.1} parent=27 // pred_fallthru
          _
      $region28: #{tpu_custom_call.1} parent=5 // pred_fallthru
        _
      %p284 = scmp.le.s32.totalorder 2, %s14
      // Predicated region
      $region37: #{tpu_custom_call.1} parent=5 // pred_check
        %p285 = pneg %p284
      $region38: #{tpu_custom_call.1} parent=5 // pred_check_branch
        %287 = sbr.rel (%p285) target = $region40
      $region39: #{tpu_custom_call.1} parent=5 // pred_region
        %s288 = ssub.s32 %s14, 2
        // Predicated region
        $region41: #{tpu_custom_call.1} parent=39 // pred_check
          %p289 = pneg %p106
        $region42: #{tpu_custom_call.1} parent=39 // pred_check_branch
          %291 = sbr.rel (%p289) target = $region44
        $region43: #{tpu_custom_call.1} parent=39 // pred_region
          %s292 = sand.u32 %s91, 1
          %s293 = scalar_lea.sflag [#allocation4], %s292
          %s294 = sand.u32 %s91, 1
          %s295 = smul.addr %s294, 8
          %s296 = scalar_lea.vmem [#allocation5], %s295
          %297 = dma.done %s293, 128
        $region44: #{tpu_custom_call.1} parent=39 // pred_fallthru
          _
      $region40: #{tpu_custom_call.1} parent=5 // pred_fallthru
        _
    $region6: #{tpu_custom_call.1} parent=1 // loop_footer
      %s18 = sadd.s32 1, %s14
    $region7: #{tpu_custom_call.1} parent=1 // loop_footer_branch
      %13 = sbr.rel target = $region3
    $region8: #{tpu_custom_call.1} parent=1 // loop_exit
      _
    %298 = vsyncpa [#allocation3], 1
    %s299 = scalar_lea.sflag [#allocation3], 1
    %300 = vsyncpa %s299, 1
    %301 = vsyncpa [#allocation4], 1
    %s302 = scalar_lea.sflag [#allocation4], 1
    %303 = vsyncpa %s302, 1

</llo_original>
